<compile_context>
chip_gen: v6e
topology: v6e:2x2x1
jax: 0.10.0
libtpu: 0.0.40
codegen_flags: <defaults>
</compile_context>

<pallas_src>
import jax
import jax.numpy as jnp
from jax.experimental import pallas as pl
from jax.experimental.pallas import tpu as pltpu


def _forward_rows(xT, w1_ref, b1_ref, w2t_ref, In, Out):
    """relu(W1 @ x + b1) then per-output-row logits (bias not yet added).

    xT: [In, TB] array;  returns list of Out arrays of shape [1, TB].
    """
    w1 = w1_ref[...]                                      # [H, In]
    if In <= 8:
        # Tiny K: broadcast multiply-accumulate on the VPU (skip the MXU).
        h = w1[:, 0:1] * xT[0:1, :]
        for k in range(1, In):
            h = h + w1[:, k:k + 1] * xT[k:k + 1, :]
    else:
        h = jnp.dot(w1, xT, preferred_element_type=jnp.float32)
    h = jnp.maximum(h + b1_ref[...], 0.0)                 # ReLU (dropout p=0 -> id)
    w2t = w2t_ref[...]                                    # [H, Out]
    # Tiny N: unrolled VPU multiply + XLU sublane-reduce, lane-dense results.
    return [jnp.sum(w2t[:, o:o + 1] * h, axis=0, keepdims=True) for o in range(Out)]


def _make_single_tile_kernel(*, In, Out):
    """One-pass kernel for the case where the whole batch fits in one tile."""

    def kernel(xT_ref, w1_ref, b1_ref, w2t_ref, b2_ref, o_ref):
        rows = _forward_rows(xT_ref[...], w1_ref, b1_ref, w2t_ref, In, Out)
        for o in range(Out):
            r = rows[o] + b2_ref[o:o + 1, :]              # [1, B]
            m = jnp.max(r, axis=1, keepdims=True)         # softmax over batch (lanes)
            e = jnp.exp(r - m)
            s = jnp.sum(e, axis=1, keepdims=True)
            # approx=False keeps us inside the 1e-5 tolerance vs the reference.
            o_ref[o:o + 1, :] = e * pl.reciprocal(s, approx=False)

    return kernel


def _make_two_pass_kernel(*, B, TB, In, Out, cache_logits):
    """Two-pass (stats / normalize) kernel for the multi-tile case."""
    needs_mask = (B % TB) != 0  # last batch tile has out-of-bounds columns

    def kernel(xT_ref, w1_ref, b1_ref, w2t_ref, b2_ref, o_ref, m_sc, s_sc, *rest):
        # xT_ref : [In, TB]   w1_ref : [H, In]   b1_ref : [H, 1]
        # w2t_ref: [H, Out]   b2_ref : [Out, 1]  o_ref  : [Out, TB]
        # m_sc, s_sc: [Out, 1] running max / running sum-of-exp over the batch.
        # rest[0] (optional): [num_tiles, Out, TB] VMEM logits cache.
        cache_ref = rest[0] if cache_logits else None
        p = pl.program_id(0)  # 0: stats pass, 1: normalize pass
        t = pl.program_id(1)  # batch tile index

        @pl.when(jnp.logical_and(p == 0, t == 0))
        def _init():
            m_sc[...] = jnp.full_like(m_sc, -jnp.inf)
            s_sc[...] = jnp.zeros_like(s_sc)

        def logits_tile():
            rows = _forward_rows(xT_ref[...], w1_ref, b1_ref, w2t_ref, In, Out)
            return jnp.concatenate(rows, axis=0) + b2_ref[...]   # [Out, TB]

        @pl.when(p == 0)
        def _stats():
            logits = logits_tile()
            if needs_mask:
                # Softmax is over the batch axis -> out-of-bounds (edge-block)
                # columns must not contribute to max/sum.  exp(-inf) == 0.
                col = t * TB + jax.lax.broadcasted_iota(jnp.int32, (Out, TB), 1)
                logits = jnp.where(col < B, logits, -jnp.inf)
            if cache_logits:
                cache_ref[t] = logits                      # persists across passes
            m_old = m_sc[...]
            m_new = jnp.maximum(m_old, jnp.max(logits, axis=1, keepdims=True))
            # Rescale previously accumulated sums to the new running max.
            s_sc[...] = (s_sc[...] * jnp.exp(m_old - m_new)
                         + jnp.sum(jnp.exp(logits - m_new), axis=1, keepdims=True))
            m_sc[...] = m_new
            # NOTE: no o_ref write here -- the output index_map pins the block
            # during pass 0, so nothing is written back to HBM.

        @pl.when(p == 1)
        def _normalize():
            logits = cache_ref[t] if cache_logits else logits_tile()
            e = jnp.exp(logits - m_sc[...])
            o_ref[...] = e * pl.reciprocal(s_sc[...], approx=False)

    return kernel


def netmodel_forward(x, w1, b1, w2, b2, *, tb=1024,
                     vmem_cache_budget_bytes=8 * 1024 * 1024,
                     batch_major_output=True):
    """Forward pass of `netmodel` (default config).

    x : [B, In] float32
    w1: [H, In], b1: [H], w2: [Out, H], b2: [Out]   (PyTorch nn.Linear layout)
    returns softmax(relu(x @ w1.T + b1) @ w2.T + b2, axis=0) as [B, Out]
    (or [Out, B] when batch_major_output=False, which skips the final
    wrapper-side transpose).
    """
    B, In = x.shape
    H, In_w = w1.shape
    Out, H_w = w2.shape
    assert In_w == In and H_w == H and b1.shape == (H,) and b2.shape == (Out,)
    assert tb % 128 == 0, "batch tile must be a multiple of 128 (lane width)"

    # Batch on the lane (last) axis.  For In == 1 the transpose is a free
    # reshape; no padding copy -- ragged tails are handled via edge blocks.
    xT = x.reshape(1, B) if In == 1 else x.T           # [In, B]
    b1_2d = b1.reshape(H, 1)
    b2_2d = b2.reshape(Out, 1)
    w2t = w2.T                                         # [H, Out]

    TB = min(tb, pl.cdiv(B, 128) * 128)
    num_tiles = pl.cdiv(B, TB)

    if num_tiles == 1:
        # Single-tile fast path: one grid step, one x read, no stats scratch.
        out_t = pl.pallas_call(
            _make_single_tile_kernel(In=In, Out=Out),
            out_shape=jax.ShapeDtypeStruct((Out, B), jnp.float32),
            grid_spec=pltpu.PrefetchScalarGridSpec(
                num_scalar_prefetch=0,
                grid=(1,),
                in_specs=[
                    pl.BlockSpec((In, B), lambda i: (0, 0)),    # x^T (whole batch)
                    pl.BlockSpec((H, In), lambda i: (0, 0)),    # w1
                    pl.BlockSpec((H, 1), lambda i: (0, 0)),     # b1
                    pl.BlockSpec((H, Out), lambda i: (0, 0)),   # w2^T
                    pl.BlockSpec((Out, 1), lambda i: (0, 0)),   # b2
                ],
                out_specs=pl.BlockSpec((Out, B), lambda i: (0, 0)),
            ),
            compiler_params=pltpu.CompilerParams(
                dimension_semantics=("arbitrary",)),
        )(xT, w1, b1_2d, w2t, b2_2d)
    else:
        # Two-pass online softmax over batch tiles.
        # VMEM logits cache: [num_tiles, Out, TB] f32; Out<8 pads to 8 sublanes.
        padded_rows = ((Out + 7) // 8) * 8
        cache_bytes = num_tiles * TB * padded_rows * 4
        cache_logits = cache_bytes <= vmem_cache_budget_bytes

        if cache_logits:
            # Pass 1 never reads x -> pin its block index (no re-read DMAs).
            x_index_map = lambda p, t: (0, t * (1 - p))
        else:
            x_index_map = lambda p, t: (0, t)

        scratch = [
            pltpu.VMEM((Out, 1), jnp.float32),   # running max over batch
            pltpu.VMEM((Out, 1), jnp.float32),   # running sum of exp
        ]
        if cache_logits:
            scratch.append(pltpu.VMEM((num_tiles, Out, TB), jnp.float32))

        out_t = pl.pallas_call(
            _make_two_pass_kernel(B=B, TB=TB, In=In, Out=Out,
                                  cache_logits=cache_logits),
            out_shape=jax.ShapeDtypeStruct((Out, B), jnp.float32),
            grid_spec=pltpu.PrefetchScalarGridSpec(
                num_scalar_prefetch=0,
                grid=(2, num_tiles),              # (pass, batch tile)
                in_specs=[
                    pl.BlockSpec((In, TB), x_index_map),           # x^T tile
                    pl.BlockSpec((H, In), lambda p, t: (0, 0)),    # w1 (resident)
                    pl.BlockSpec((H, 1), lambda p, t: (0, 0)),     # b1 (resident)
                    pl.BlockSpec((H, Out), lambda p, t: (0, 0)),   # w2^T (resident)
                    pl.BlockSpec((Out, 1), lambda p, t: (0, 0)),   # b2 (resident)
                ],
                # During pass 0 the output block index stays (0, 0) -> no
                # per-tile zero writeback; pass 1 fully writes each tile before
                # its block index advances.
                out_specs=pl.BlockSpec((Out, TB), lambda p, t: (0, t * p)),
                scratch_shapes=scratch,
            ),
            compiler_params=pltpu.CompilerParams(
                # Both axes carry softmax-stat state / ordering -> sequential.
                dimension_semantics=("arbitrary", "arbitrary"),
            ),
        )(xT, w1, b1_2d, w2t, b2_2d)

    if batch_major_output:
        return out_t.T        # [B, Out] -- PyTorch module layout
    return out_t              # [Out, B] -- skips the wrapper transpose


def init_params(key, input_layer=1, node_per_hidden=32, outputs=2):
    """PyTorch-layout init mimicking nn.Linear defaults (U[-1/sqrt(fan_in), +])."""
    k1, k2, k3, k4 = jax.random.split(key, 4)
    bound1 = 1.0 / jnp.sqrt(jnp.float32(input_layer))
    bound2 = 1.0 / jnp.sqrt(jnp.float32(node_per_hidden))
    w1 = jax.random.uniform(k1, (node_per_hidden, input_layer), jnp.float32,
                            minval=-bound1, maxval=bound1)
    b1 = jax.random.uniform(k2, (node_per_hidden,), jnp.float32,
                            minval=-bound1, maxval=bound1)
    w2 = jax.random.uniform(k3, (outputs, node_per_hidden), jnp.float32,
                            minval=-bound2, maxval=bound2)
    b2 = jax.random.uniform(k4, (outputs,), jnp.float32,
                            minval=-bound2, maxval=bound2)
    return w1, b1, w2, b2


def _reference(x, w1, b1, w2, b2):
    h = jnp.maximum(jnp.dot(x, w1.T, precision="highest") + b1, 0.0)
    logits = jnp.dot(h, w2.T, precision="highest") + b2
    return jax.nn.softmax(logits, axis=0)     # dim=0, exactly as in the module


if __name__ == "__main__":
    key = jax.random.PRNGKey(0)
    kx, kp = jax.random.split(key)

    # input_layer=1, node_per_hidden=32, outputs=2.  B=300 exercises the
    # single-tile fast path (default tb) and, with tb=128, three batch tiles
    # including a ragged edge tile (300 = 2*128 + 44).
    B, In, H, Out = 300, 1, 32, 2
    x = jax.random.normal(kx, (B, In), jnp.float32)
    w1, b1, w2, b2 = init_params(kp, input_layer=In, node_per_hidden=H, outputs=Out)
    y_ref = _reference(x, w1, b1, w2, b2)

    # 1) single-tile one-pass fast path (B <= tb)
    y_fast = jax.block_until_ready(netmodel_forward(x, w1, b1, w2, b2))
    # 2) multi-tile two-pass path with the VMEM logits cache
    y_tiled = jax.block_until_ready(netmodel_forward(x, w1, b1, w2, b2, tb=128))
    # 3) multi-tile fallback without the cache (recompute in the normalize pass)
    y_nocache = jax.block_until_ready(
        netmodel_forward(x, w1, b1, w2, b2, tb=128, vmem_cache_budget_bytes=0))

    for y in (y_fast, y_tiled, y_nocache):
        assert y.shape == (B, Out)
        assert jnp.allclose(y, y_ref, atol=1e-5, rtol=1e-5), "mismatch vs JAX reference"

    print("KERNEL_OK")
</pallas_src>

<mosaic_0001>
module attributes {stable_mosaic.version = 11 : i64} {
  func.func @kernel(%arg0: i32, %arg1: memref<1x300xf32, #tpu.memory_space<vmem>>, %arg2: memref<32x1xf32, #tpu.memory_space<vmem>>, %arg3: memref<32x1xf32, #tpu.memory_space<vmem>>, %arg4: memref<32x2xf32, #tpu.memory_space<vmem>>, %arg5: memref<2x1xf32, #tpu.memory_space<vmem>>, %arg6: memref<2x300xf32, #tpu.memory_space<vmem>>) attributes {dimension_semantics = [#tpu.dimension_semantics<arbitrary>], iteration_bounds = array<i64: 1>, scalar_prefetch = 0 : i64, scratch_operands = 0 : i64, tpu.core_type = #tpu.core_type<tc>, window_params = [{pipeline_mode = #tpu.pipeline_mode<synchronous>, transform_indices = @transform_0, window_bounds = array<i64: 1, 300>}, {pipeline_mode = #tpu.pipeline_mode<synchronous>, transform_indices = @transform_1, window_bounds = array<i64: 32, 1>}, {pipeline_mode = #tpu.pipeline_mode<synchronous>, transform_indices = @transform_2, window_bounds = array<i64: 32, 1>}, {pipeline_mode = #tpu.pipeline_mode<synchronous>, transform_indices = @transform_3, window_bounds = array<i64: 32, 2>}, {pipeline_mode = #tpu.pipeline_mode<synchronous>, transform_indices = @transform_4, window_bounds = array<i64: 2, 1>}, {pipeline_mode = #tpu.pipeline_mode<synchronous>, transform_indices = @transform_5, window_bounds = array<i64: 2, 300>}]} {
    %c0 = arith.constant 0 : index
    %c0_0 = arith.constant 0 : index
    %0 = vector.load %arg1[%c0, %c0_0] : memref<1x300xf32, #tpu.memory_space<vmem>>, vector<1x300xf32>
    %c0_1 = arith.constant 0 : index
    %c0_2 = arith.constant 0 : index
    %1 = vector.load %arg2[%c0_1, %c0_2] : memref<32x1xf32, #tpu.memory_space<vmem>>, vector<32x1xf32>
    %2 = vector.broadcast %1 : vector<32x1xf32> to vector<32x300xf32>
    %3 = vector.broadcast %0 : vector<1x300xf32> to vector<32x300xf32>
    %4 = arith.mulf %2, %3 : vector<32x300xf32>
    %c0_3 = arith.constant 0 : index
    %c0_4 = arith.constant 0 : index
    %5 = vector.load %arg3[%c0_3, %c0_4] : memref<32x1xf32, #tpu.memory_space<vmem>>, vector<32x1xf32>
    %6 = vector.broadcast %5 : vector<32x1xf32> to vector<32x300xf32>
    %7 = arith.addf %4, %6 : vector<32x300xf32>
    %cst = arith.constant 0.000000e+00 : f32
    %8 = vector.broadcast %cst : f32 to vector<32x300xf32>
    %9 = arith.maximumf %7, %8 : vector<32x300xf32>
    %c0_5 = arith.constant 0 : index
    %c0_6 = arith.constant 0 : index
    %10 = vector.load %arg4[%c0_5, %c0_6] : memref<32x2xf32, #tpu.memory_space<vmem>>, vector<32x2xf32>
    %11 = vector.extract_strided_slice %10 {offsets = [0, 0], sizes = [32, 1], strides = [1, 1]} : vector<32x2xf32> to vector<32x1xf32>
    %12 = vector.broadcast %11 : vector<32x1xf32> to vector<32x300xf32>
    %13 = arith.mulf %12, %9 : vector<32x300xf32>
    %cst_7 = arith.constant dense<0.000000e+00> : vector<300xf32>
    %14 = vector.multi_reduction <add>, %13, %cst_7 [0] : vector<32x300xf32> to vector<300xf32>
    %15 = vector.shape_cast %14 : vector<300xf32> to vector<1x300xf32>
    %16 = vector.extract_strided_slice %10 {offsets = [0, 1], sizes = [32, 1], strides = [1, 1]} : vector<32x2xf32> to vector<32x1xf32>
    %17 = vector.broadcast %16 : vector<32x1xf32> to vector<32x300xf32>
    %18 = arith.mulf %17, %9 : vector<32x300xf32>
    %cst_8 = arith.constant dense<0.000000e+00> : vector<300xf32>
    %19 = vector.multi_reduction <add>, %18, %cst_8 [0] : vector<32x300xf32> to vector<300xf32>
    %20 = vector.shape_cast %19 : vector<300xf32> to vector<1x300xf32>
    %c0_9 = arith.constant 0 : index
    %c0_10 = arith.constant 0 : index
    %21 = vector.load %arg5[%c0_9, %c0_10] : memref<2x1xf32, #tpu.memory_space<vmem>>, vector<1x1xf32>
    %22 = vector.broadcast %21 : vector<1x1xf32> to vector<1x300xf32>
    %23 = arith.addf %15, %22 : vector<1x300xf32>
    %cst_11 = arith.constant dense<0xFF800000> : vector<1xf32>
    %24 = vector.multi_reduction <maximumf>, %23, %cst_11 [1] : vector<1x300xf32> to vector<1xf32>
    %25 = vector.shape_cast %24 : vector<1xf32> to vector<1x1xf32>
    %26 = vector.broadcast %25 : vector<1x1xf32> to vector<1x300xf32>
    %27 = arith.subf %23, %26 : vector<1x300xf32>
    %28 = math.exp %27 : vector<1x300xf32>
    %cst_12 = arith.constant dense<0.000000e+00> : vector<1xf32>
    %29 = vector.multi_reduction <add>, %28, %cst_12 [1] : vector<1x300xf32> to vector<1xf32>
    %30 = vector.shape_cast %29 : vector<1xf32> to vector<1x1xf32>
    %31 = tpu.reciprocal %30 : vector<1x1xf32> -> vector<1x1xf32>
    %32 = vector.broadcast %31 : vector<1x1xf32> to vector<1x300xf32>
    %33 = arith.mulf %28, %32 : vector<1x300xf32>
    %c0_13 = arith.constant 0 : index
    %c0_14 = arith.constant 0 : index
    %34 = vector.load %arg6[%c0_13, %c0_14] : memref<2x300xf32, #tpu.memory_space<vmem>>, vector<1x300xf32>
    tpu.vector_store %arg6[%c0_13, %c0_14], %33 {strides = array<i32>} : memref<2x300xf32, #tpu.memory_space<vmem>>, vector<1x300xf32>,
    %c1 = arith.constant 1 : index
    %c0_15 = arith.constant 0 : index
    %35 = vector.load %arg5[%c1, %c0_15] : memref<2x1xf32, #tpu.memory_space<vmem>>, vector<1x1xf32>
    %36 = vector.broadcast %35 : vector<1x1xf32> to vector<1x300xf32>
    %37 = arith.addf %20, %36 : vector<1x300xf32>
    %cst_16 = arith.constant dense<0xFF800000> : vector<1xf32>
    %38 = vector.multi_reduction <maximumf>, %37, %cst_16 [1] : vector<1x300xf32> to vector<1xf32>
    %39 = vector.shape_cast %38 : vector<1xf32> to vector<1x1xf32>
    %40 = vector.broadcast %39 : vector<1x1xf32> to vector<1x300xf32>
    %41 = arith.subf %37, %40 : vector<1x300xf32>
    %42 = math.exp %41 : vector<1x300xf32>
    %cst_17 = arith.constant dense<0.000000e+00> : vector<1xf32>
    %43 = vector.multi_reduction <add>, %42, %cst_17 [1] : vector<1x300xf32> to vector<1xf32>
    %44 = vector.shape_cast %43 : vector<1xf32> to vector<1x1xf32>
    %45 = tpu.reciprocal %44 : vector<1x1xf32> -> vector<1x1xf32>
    %46 = vector.broadcast %45 : vector<1x1xf32> to vector<1x300xf32>
    %47 = arith.mulf %42, %46 : vector<1x300xf32>
    %c1_18 = arith.constant 1 : index
    %c0_19 = arith.constant 0 : index
    %48 = vector.load %arg6[%c1_18, %c0_19] : memref<2x300xf32, #tpu.memory_space<vmem>>, vector<1x300xf32>
    tpu.vector_store %arg6[%c1_18, %c0_19], %47 {strides = array<i32>} : memref<2x300xf32, #tpu.memory_space<vmem>>, vector<1x300xf32>,
    return
  }
  func.func @transform_0(%arg0: i32) -> (i32, i32) {
    %c0_i32 = arith.constant 0 : i32
    %c0_i32_0 = arith.constant 0 : i32
    %c0_i32_1 = arith.constant 0 : i32
    return %c0_i32, %c0_i32_0 : i32, i32
  }
  func.func @transform_1(%arg0: i32) -> (i32, i32) {
    %c0_i32 = arith.constant 0 : i32
    %c0_i32_0 = arith.constant 0 : i32
    %c0_i32_1 = arith.constant 0 : i32
    return %c0_i32, %c0_i32_0 : i32, i32
  }
  func.func @transform_2(%arg0: i32) -> (i32, i32) {
    %c0_i32 = arith.constant 0 : i32
    %c0_i32_0 = arith.constant 0 : i32
    %c0_i32_1 = arith.constant 0 : i32
    return %c0_i32, %c0_i32_0 : i32, i32
  }
  func.func @transform_3(%arg0: i32) -> (i32, i32) {
    %c0_i32 = arith.constant 0 : i32
    %c0_i32_0 = arith.constant 0 : i32
    %c0_i32_1 = arith.constant 0 : i32
    return %c0_i32, %c0_i32_0 : i32, i32
  }
  func.func @transform_4(%arg0: i32) -> (i32, i32) {
    %c0_i32 = arith.constant 0 : i32
    %c0_i32_0 = arith.constant 0 : i32
    %c0_i32_1 = arith.constant 0 : i32
    return %c0_i32, %c0_i32_0 : i32, i32
  }
  func.func @transform_5(%arg0: i32) -> (i32, i32) {
    %c0_i32 = arith.constant 0 : i32
    %c0_i32_0 = arith.constant 0 : i32
    %c0_i32_1 = arith.constant 0 : i32
    return %c0_i32, %c0_i32_0 : i32, i32
  }
}

</mosaic_0001>

<llo_original>
// kernel: tpu_custom_call.1
$region0: #{tpu_custom_call.1}
  #allocation0 [shape = 'u32[]', space=smem, size = 0x4, offset = 0x4, fixed_abs, tag = 'smem constant byte address 0x4 - core index']
  #allocation1 [shape = 'u32[144,128]{1,0:T(1,128)}', space=vmem, size = 0x12000, scoped, tag = 'internal scratch']
  %s0 = inlined_call_operand.vmem [shape: f32[1,300], index: 0, kind: input, shape index: {}]
  %s1 = inlined_call_operand.vmem [shape: f32[32,1], index: 1, kind: input, shape index: {}]
  %s2 = inlined_call_operand.vmem [shape: f32[32,1], index: 2, kind: input, shape index: {}]
  %s3 = inlined_call_operand.vmem [shape: f32[32,2], index: 3, kind: input, shape index: {}]
  %s4 = inlined_call_operand.vmem [shape: f32[2,1], index: 4, kind: input, shape index: {}]
  %s5 = inlined_call_operand.hbm [shape: f32[2,300], index: 5, kind: output, shape index: {}]
  %s6 = sld [smem:[#allocation0]]
  $region30: #{tpu_custom_call.1} parent=0
    _
  %s8 = ssub.s32 1, %s6
  %s9 = scalar_select 0, %s8, %s6
  $region1: #{tpu_custom_call.1} parent=0
    #allocation2 [shape = 'u8[3072]{0}', space=vmem, size = 0xc00, scoped, tag = 'output window, operand 0, single buffered']
    #allocation3 [shape = 's32[1]{0}', space=sflag, size = 0x4, scoped, tag = 'scoped memory for tpu_custom_call.1']
    %10 = vsyncpa [#allocation3], 0
    // Predicated region
    $region2: #{tpu_custom_call.1} parent=1 // pred_check
      _
    $region3: #{tpu_custom_call.1} parent=1 // pred_check_branch
      %12 = sbr.rel (0) target = $region5
    $region4: #{tpu_custom_call.1} parent=1 // pred_region
      _
    $region5: #{tpu_custom_call.1} parent=1 // pred_fallthru
      _
    // Predicated region
    $region6: #{tpu_custom_call.1} parent=1 // pred_check
      _
    $region7: #{tpu_custom_call.1} parent=1 // pred_check_branch
      %14 = sbr.rel (0) target = $region9
    $region8: #{tpu_custom_call.1} parent=1 // pred_region
      _
    $region9: #{tpu_custom_call.1} parent=1 // pred_fallthru
      _
    // Predicated region
    $region10: #{tpu_custom_call.1} parent=1 // pred_check
      _
    $region11: #{tpu_custom_call.1} parent=1 // pred_check_branch
      %16 = sbr.rel (0) target = $region13
    $region12: #{tpu_custom_call.1} parent=1 // pred_region
      _
    $region13: #{tpu_custom_call.1} parent=1 // pred_fallthru
      _
    // Predicated region
    $region14: #{tpu_custom_call.1} parent=1 // pred_check
      _
    $region15: #{tpu_custom_call.1} parent=1 // pred_check_branch
      %18 = sbr.rel (0) target = $region17
    $region16: #{tpu_custom_call.1} parent=1 // pred_region
      _
    $region17: #{tpu_custom_call.1} parent=1 // pred_fallthru
      _
    // Predicated region
    $region18: #{tpu_custom_call.1} parent=1 // pred_check
      _
    $region19: #{tpu_custom_call.1} parent=1 // pred_check_branch
      %20 = sbr.rel (0) target = $region21
    $region20: #{tpu_custom_call.1} parent=1 // pred_region
      _
    $region21: #{tpu_custom_call.1} parent=1 // pred_fallthru
      _
    %v21 = vld [vmem:[%s0] sm:$0x7]
    %v22 = vld [vmem:[%s1] sm:$0xff]
    %v23 = vld [vmem:[%s1 + $0x8] sm:$0xff]
    %v24 = vld [vmem:[%s1 + $0x10] sm:$0xff]
    %v25 = vld [vmem:[%s1 + $0x18] sm:$0xff]
    %27 = vset.pattern.permute.xlu0 0
    %28 = vperm.xlu0 %27, %v22
    %v29 = vpop.permute.xlu0 %28
    %32 = vset.pattern.permute.xlu0 0
    %33 = vperm.xlu0 %32, %v23
    %v34 = vpop.permute.xlu0 %33
    %37 = vset.pattern.permute.xlu0 0
    %38 = vperm.xlu0 %37, %v24
    %v39 = vpop.permute.xlu0 %38
    %42 = vset.pattern.permute.xlu0 0
    %43 = vperm.xlu0 %42, %v25
    %v44 = vpop.permute.xlu0 %43
    %v47 = vlaneseq
    %v48 = vshrl.u32 %v47, 7
    %v49 = vsub.s32 0, %v48
    %v50 = vrot.slane %v21, %v49
    %v51 = vlaneseq
    %v52 = vshrl.u32 %v51, 7
    %v53 = vsub.s32 1, %v52
    %v54 = vrot.slane %v21, %v53
    %v55 = vlaneseq
    %v56 = vshrl.u32 %v55, 7
    %v57 = vsub.s32 2, %v56
    %v58 = vrot.slane %v21, %v57
    %v62 = vmul.f32 %v29, %v50
    %v63 = vmul.f32 %v29, %v54
    %v64 = vmul.f32 %v29, %v58
    %v65 = vmul.f32 %v34, %v50
    %v66 = vmul.f32 %v34, %v54
    %v67 = vmul.f32 %v34, %v58
    %v68 = vmul.f32 %v39, %v50
    %v69 = vmul.f32 %v39, %v54
    %v70 = vmul.f32 %v39, %v58
    %v71 = vmul.f32 %v44, %v50
    %v72 = vmul.f32 %v44, %v54
    %v73 = vmul.f32 %v44, %v58
    %v74 = vld [vmem:[%s2] sm:$0xff]
    %v75 = vld [vmem:[%s2 + $0x8] sm:$0xff]
    %v76 = vld [vmem:[%s2 + $0x10] sm:$0xff]
    %v77 = vld [vmem:[%s2 + $0x18] sm:$0xff]
    %79 = vset.pattern.permute.xlu0 0
    %80 = vperm.xlu0 %79, %v74
    %v81 = vpop.permute.xlu0 %80
    %84 = vset.pattern.permute.xlu0 0
    %85 = vperm.xlu0 %84, %v75
    %v86 = vpop.permute.xlu0 %85
    %89 = vset.pattern.permute.xlu0 0
    %90 = vperm.xlu0 %89, %v76
    %v91 = vpop.permute.xlu0 %90
    %94 = vset.pattern.permute.xlu0 0
    %95 = vperm.xlu0 %94, %v77
    %v96 = vpop.permute.xlu0 %95
    %v98 = vadd.f32 %v62, %v81
    %v99 = vadd.f32 %v63, %v81
    %v100 = vadd.f32 %v64, %v81
    %v101 = vadd.f32 %v65, %v86
    %v102 = vadd.f32 %v66, %v86
    %v103 = vadd.f32 %v67, %v86
    %v104 = vadd.f32 %v68, %v91
    %v105 = vadd.f32 %v69, %v91
    %v106 = vadd.f32 %v70, %v91
    %v107 = vadd.f32 %v71, %v96
    %v108 = vadd.f32 %v72, %v96
    %v109 = vadd.f32 %v73, %v96
    %v110 = vmax.f32 %v98, 0.0
    %v111 = vmax.f32 %v99, 0.0
    %v112 = vmax.f32 %v100, 0.0
    %v113 = vmax.f32 %v101, 0.0
    %v114 = vmax.f32 %v102, 0.0
    %v115 = vmax.f32 %v103, 0.0
    %v116 = vmax.f32 %v104, 0.0
    %v117 = vmax.f32 %v105, 0.0
    %v118 = vmax.f32 %v106, 0.0
    %v119 = vmax.f32 %v107, 0.0
    %v120 = vmax.f32 %v108, 0.0
    %v121 = vmax.f32 %v109, 0.0
    %v122 = vld [vmem:[%s3] sm:$0xff]
    %v123 = vld [vmem:[%s3 + $0x8] sm:$0xff]
    %v124 = vld [vmem:[%s3 + $0x10] sm:$0xff]
    %v125 = vld [vmem:[%s3 + $0x18] sm:$0xff]
    %127 = vset.pattern.permute.xlu0 0
    %128 = vperm.xlu0 %127, %v122
    %v129 = vpop.permute.xlu0 %128
    %132 = vset.pattern.permute.xlu0 0
    %133 = vperm.xlu0 %132, %v123
    %v134 = vpop.permute.xlu0 %133
    %137 = vset.pattern.permute.xlu0 0
    %138 = vperm.xlu0 %137, %v124
    %v139 = vpop.permute.xlu0 %138
    %142 = vset.pattern.permute.xlu0 0
    %143 = vperm.xlu0 %142, %v125
    %v144 = vpop.permute.xlu0 %143
    %v146 = vmul.f32 %v129, %v110
    %v147 = vmul.f32 %v129, %v111
    %v148 = vmul.f32 %v129, %v112
    %v149 = vmul.f32 %v134, %v113
    %v150 = vmul.f32 %v134, %v114
    %v151 = vmul.f32 %v134, %v115
    %v152 = vmul.f32 %v139, %v116
    %v153 = vmul.f32 %v139, %v117
    %v154 = vmul.f32 %v139, %v118
    %v155 = vmul.f32 %v144, %v119
    %v156 = vmul.f32 %v144, %v120
    %v157 = vmul.f32 %v144, %v121
    %v158 = vadd.f32 %v146, %v149
    %v159 = vadd.f32 %v158, %v152
    %v160 = vadd.f32 %v159, %v155
    %v161 = vrot.slane %v160, 4
    %v162 = vadd.f32 %v160, %v161
    %v163 = vrot.slane %v162, 2
    %v164 = vadd.f32 %v162, %v163
    %v165 = vrot.slane %v164, 1
    %v166 = vadd.f32 %v164, %v165
    %v167 = vadd.f32 %v147, %v150
    %v168 = vadd.f32 %v167, %v153
    %v169 = vadd.f32 %v168, %v156
    %v170 = vrot.slane %v169, 4
    %v171 = vadd.f32 %v169, %v170
    %v172 = vrot.slane %v171, 2
    %v173 = vadd.f32 %v171, %v172
    %v174 = vrot.slane %v173, 1
    %v175 = vadd.f32 %v173, %v174
    %vm176 = vcmask 359424
    %v177 = vsel %vm176, %v148, 0.0
    %v178 = vsel %vm176, %v151, 0.0
    %v179 = vadd.f32 %v177, %v178
    %v180 = vsel %vm176, %v154, 0.0
    %v181 = vadd.f32 %v179, %v180
    %v182 = vsel %vm176, %v157, 0.0
    %v183 = vadd.f32 %v181, %v182
    %v184 = vrot.slane %v183, 4
    %v185 = vadd.f32 %v183, %v184
    %v186 = vrot.slane %v185, 2
    %v187 = vadd.f32 %v185, %v186
    %v188 = vrot.slane %v187, 1
    %v189 = vadd.f32 %v187, %v188
    %190 = vset.pattern.permute.xlu0 1
    %191 = vperm.xlu0 %190, %v122
    %v192 = vpop.permute.xlu0 %191
    %194 = vset.pattern.permute.xlu0 1
    %195 = vperm.xlu0 %194, %v123
    %v196 = vpop.permute.xlu0 %195
    %198 = vset.pattern.permute.xlu0 1
    %199 = vperm.xlu0 %198, %v124
    %v200 = vpop.permute.xlu0 %199
    %202 = vset.pattern.permute.xlu0 1
    %203 = vperm.xlu0 %202, %v125
    %v204 = vpop.permute.xlu0 %203
    %v206 = vmul.f32 %v192, %v110
    %v207 = vmul.f32 %v192, %v111
    %v208 = vmul.f32 %v192, %v112
    %v209 = vmul.f32 %v196, %v113
    %v210 = vmul.f32 %v196, %v114
    %v211 = vmul.f32 %v196, %v115
    %v212 = vmul.f32 %v200, %v116
    %v213 = vmul.f32 %v200, %v117
    %v214 = vmul.f32 %v200, %v118
    %v215 = vmul.f32 %v204, %v119
    %v216 = vmul.f32 %v204, %v120
    %v217 = vmul.f32 %v204, %v121
    %v218 = vadd.f32 %v206, %v209
    %v219 = vadd.f32 %v218, %v212
    %v220 = vadd.f32 %v219, %v215
    %v221 = vrot.slane %v220, 4
    %v222 = vadd.f32 %v220, %v221
    %v223 = vrot.slane %v222, 2
    %v224 = vadd.f32 %v222, %v223
    %v225 = vrot.slane %v224, 1
    %v226 = vadd.f32 %v224, %v225
    %v227 = vadd.f32 %v207, %v210
    %v228 = vadd.f32 %v227, %v213
    %v229 = vadd.f32 %v228, %v216
    %v230 = vrot.slane %v229, 4
    %v231 = vadd.f32 %v229, %v230
    %v232 = vrot.slane %v231, 2
    %v233 = vadd.f32 %v231, %v232
    %v234 = vrot.slane %v233, 1
    %v235 = vadd.f32 %v233, %v234
    %v236 = vsel %vm176, %v208, 0.0
    %v237 = vsel %vm176, %v211, 0.0
    %v238 = vadd.f32 %v236, %v237
    %v239 = vsel %vm176, %v214, 0.0
    %v240 = vadd.f32 %v238, %v239
    %v241 = vsel %vm176, %v217, 0.0
    %v242 = vadd.f32 %v240, %v241
    %v243 = vrot.slane %v242, 4
    %v244 = vadd.f32 %v242, %v243
    %v245 = vrot.slane %v244, 2
    %v246 = vadd.f32 %v244, %v245
    %v247 = vrot.slane %v246, 1
    %v248 = vadd.f32 %v246, %v247
    %v249 = vld [vmem:[%s4] sm:$0x1]
    %251 = vset.pattern.permute.xlu0 0
    %252 = vperm.xlu0 %251, %v249
    %v253 = vpop.permute.xlu0 %252
    %v255 = vadd.f32 %v166, %v253
    %v256 = vadd.f32 %v175, %v253
    %v257 = vadd.f32 %v189, %v253
    %vm258 = vcmask 1040384
    %v259 = vsel %vm258, %v255, -inf
    %v260 = vsel %vm258, %v256, -inf
    %vm261 = vcmask 352256
    %v262 = vsel %vm261, %v257, -inf
    %v263 = vmax.f32 %v259, %v260
    %v264 = vmax.f32 %v263, %v262
    %265 = vmax.xlane.f32.xlu0 %v264
    %v266 = vpop.xlane.xlu0 %265
    %v267 = vsub.f32 %v255, %v266
    %v268 = vsub.f32 %v256, %v266
    %v269 = vsub.f32 %v257, %v266
    %v270 = vmul.f32 %v267, 1.442695
    %v271 = vpow.pop %v270
    %v272 = vmul.f32 %v268, 1.442695
    %v273 = vpow.pop %v272
    %v274 = vmul.f32 %v269, 1.442695
    %v275 = vpow.pop %v274
    %v276 = vsel %vm258, %v271, 0.0
    %v277 = vsel %vm258, %v273, 0.0
    %v278 = vadd.f32 %v276, %v277
    %v279 = vsel %vm261, %v275, 0.0
    %v280 = vadd.f32 %v278, %v279
    %281 = vadd.xlane.f32.xlu0 %v280
    %v282 = vpop.xlane.xlu0 %281
    %v283 = vrcp.pop %v282
    %v284 = vmul.f32 %v271, %v283
    %v285 = vmul.f32 %v273, %v283
    %v286 = vmul.f32 %v275, %v283
    %v290 = vcombine.low %v284, %v285
    %v292 = vunpack.c.l.s4 1966171168
    %v293 = vunpack.c.0.s8 %v292
    %v294 = vlaneseq
    %v295 = vshrl.u32 %v294, 7
    %v296 = vsub.s32 %v293, %v295
    %v297 = vrot.slane %v290, %v296
    %v299 = vunpack.c.l.s4 1966171168
    %v300 = vunpack.c.0.s8 %v299
    %v301 = vlaneseq
    %v302 = vshrl.u32 %v301, 7
    %v303 = vsub.s32 %v300, %v302
    %v304 = vrot.slane %v286, %v303
    %v305 = vcombine.low %v297, %v304
    %v307 = vunpack.c.l.s4 1966171168
    %v308 = vunpack.c.0.s8 %v307
    %v309 = vlaneseq
    %v310 = vshrl.u32 %v309, 7
    %v311 = vsub.s32 %v308, %v310
    %v312 = vrot.slane %v305, %v311
    %v314 = vlaneseq
    %vm315 = vcmp.ge.s32.totalorder %v314, 0
    %vm316 = vcmp.lt.s32.totalorder %v314, 300
    %vm317 = vmand %vm315, %vm316
    %318 = vst.msk [vmem:[#allocation2] ss:$2 sm:$0x7] %vm317, %v312
    %v319 = vld [vmem:[%s4 + $0x1] sm:$0x1]
    %321 = vset.pattern.permute.xlu0 0
    %322 = vperm.xlu0 %321, %v319
    %v323 = vpop.permute.xlu0 %322
    %v325 = vadd.f32 %v226, %v323
    %v326 = vadd.f32 %v235, %v323
    %v327 = vadd.f32 %v248, %v323
    %v328 = vsel %vm258, %v325, -inf
    %v329 = vsel %vm258, %v326, -inf
    %v330 = vsel %vm261, %v327, -inf
    %v331 = vmax.f32 %v328, %v329
    %v332 = vmax.f32 %v331, %v330
    %333 = vmax.xlane.f32.xlu0 %v332
    %v334 = vpop.xlane.xlu0 %333
    %v335 = vsub.f32 %v325, %v334
    %v336 = vsub.f32 %v326, %v334
    %v337 = vsub.f32 %v327, %v334
    %v338 = vmul.f32 %v335, 1.442695
    %v339 = vpow.pop %v338
    %v340 = vmul.f32 %v336, 1.442695
    %v341 = vpow.pop %v340
    %v342 = vmul.f32 %v337, 1.442695
    %v343 = vpow.pop %v342
    %v344 = vsel %vm258, %v339, 0.0
    %v345 = vsel %vm258, %v341, 0.0
    %v346 = vadd.f32 %v344, %v345
    %v347 = vsel %vm261, %v343, 0.0
    %v348 = vadd.f32 %v346, %v347
    %349 = vadd.xlane.f32.xlu0 %v348
    %v350 = vpop.xlane.xlu0 %349
    %v351 = vrcp.pop %v350
    %v352 = vmul.f32 %v339, %v351
    %v353 = vmul.f32 %v341, %v351
    %v354 = vmul.f32 %v343, %v351
    %v358 = vcombine.low %v352, %v353
    %v360 = vunpack.c.l.s4 1966171168
    %v361 = vunpack.c.0.s8 %v360
    %v362 = vlaneseq
    %v363 = vshrl.u32 %v362, 7
    %v364 = vsub.s32 %v361, %v363
    %v365 = vrot.slane %v358, %v364
    %v367 = vunpack.c.l.s4 1966171168
    %v368 = vunpack.c.0.s8 %v367
    %v369 = vlaneseq
    %v370 = vshrl.u32 %v369, 7
    %v371 = vsub.s32 %v368, %v370
    %v372 = vrot.slane %v354, %v371
    %v373 = vcombine.low %v365, %v372
    %v375 = vunpack.c.l.s4 1966171168
    %v376 = vunpack.c.0.s8 %v375
    %v377 = vlaneseq
    %v378 = vshrl.u32 %v377, 7
    %v379 = vsub.s32 %v376, %v378
    %v380 = vrot.slane %v373, %v379
    %s382 = scalar_lea.vmem [#allocation2], 1
    %383 = vst.msk [vmem:[%s382] ss:$2 sm:$0x7] %vm317, %v380
    // Predicated region
    $region22: #{tpu_custom_call.1} parent=1 // pred_check
      _
    $region23: #{tpu_custom_call.1} parent=1 // pred_check_branch
      %385 = sbr.rel (0) target = $region25
    $region24: #{tpu_custom_call.1} parent=1 // pred_region
      %s387 = ssub.s32 96, 96
      %388 = vsyncadd [#allocation3], %s387
      %s390 = sshll.u32 [#allocation2], 4
      %s391 = int_to_ptr.vmem [resolvable:$true] %s390
      %393 = dma.vmem_to_hbm [thread:$0]  %s391, 96, %s5, [#allocation3]
    $region25: #{tpu_custom_call.1} parent=1 // pred_fallthru
      _
    // Predicated region
    $region26: #{tpu_custom_call.1} parent=1 // pred_check
      _
    $region27: #{tpu_custom_call.1} parent=1 // pred_check_branch
      %395 = sbr.rel (0) target = $region29
    $region28: #{tpu_custom_call.1} parent=1 // pred_region
      %396 = dma.done [#allocation3], 96
    $region29: #{tpu_custom_call.1} parent=1 // pred_fallthru
      _
    %397 = vsyncpa [#allocation3], 1

</llo_original>
